<compile_context>
chip_gen: v6e
topology: v6e:2x2x1
jax: 0.10.0
libtpu: 0.0.40
codegen_flags: <defaults>
</compile_context>

<pallas_src>
import math

import jax
import jax.numpy as jnp
from jax import lax
from jax.experimental import pallas as pl
from jax.experimental.pallas import tpu as pltpu

BN_EPS = 1e-5
NUM_HIDDEN = 32
NUM_BLOCKS = 6  # residual blocks conv1..conv6 (two convs each)


def _round_up(x, m):
    return (x + m - 1) // m * m


# ------------------------------ fused kernel ------------------------------

def _make_fused_kernel(W, LANES, num_blocks, roll_np_like):
    """Whole-network kernel: conv0 + 2*num_blocks residual convs + final conv."""
    OFFS = tuple((dh, dw) for dh in (-1, 0, 1) for dw in (-1, 0, 1))

    def _amount(off):
        # chosen so that rolled[:, p] == x[:, (p + off) % LANES]
        return (-off) % LANES if roll_np_like else off % LANES

    def kernel(x_ref, mask_ref, w0_ref, b0_ref, wh_ref, sres_ref, bh_ref,
               wf_ref, bf_ref, o_ref):

        def conv3x3(x, get_w, *, shift, scale=None, residual=None, relu=False):
            """3x3 SAME conv = 9 per-tap (Cout,Cin)@(Cin,LANES) bf16 MXU dots."""
            xb = x.astype(jnp.bfloat16)                 # one cast per layer
            # center tap: no roll, no mask
            acc = jnp.dot(get_w(4), xb, preferred_element_type=jnp.float32)
            for t, (dh, dw) in enumerate(OFFS):
                if t == 4:
                    continue
                v = pltpu.roll(xb, _amount(dh * W + dw), 1)
                d = jnp.dot(get_w(t), v, preferred_element_type=jnp.float32)
                acc = acc + d * mask_ref[t]             # zero halo contributions
            if residual is not None:
                acc = acc + residual                    # bn(conv(y) + x)
            if scale is not None:
                acc = acc * scale
            acc = acc + shift
            if relu:
                acc = jnp.maximum(acc, 0.0)
            return acc

        # conv0 + bn0 (BN scale folded into weights, no relu)
        x = conv3x3(x_ref[0], lambda t: w0_ref[t], shift=b0_ref[...])

        # residual blocks: y = relu(bn(conv(x))); x = relu(bn(conv(y) + x))
        for blk in range(num_blocks):
            l1, l2 = 2 * blk, 2 * blk + 1
            y = conv3x3(x, lambda t, l=l1: wh_ref[9 * l + t],
                        shift=bh_ref[l1], relu=True)
            x = conv3x3(y, lambda t, l=l2: wh_ref[9 * l + t],
                        shift=bh_ref[l2], scale=sres_ref[blk],
                        residual=x, relu=True)

        # final conv (bias only, no BN, no relu)
        out = conv3x3(x, lambda t: wf_ref[t], shift=bf_ref[...])
        o_ref[0] = out.astype(o_ref.dtype)

    return kernel


def _detect_roll_is_numpy_like(width=512):
    """Probe pltpu.roll's direction once (multi-vreg width) for robustness.

    np.roll semantics: roll(iota, 1)[0] == last element.
    """
    def probe(x_ref, o_ref):
        o_ref[...] = pltpu.roll(x_ref[...], 1, 1)

    x = lax.broadcasted_iota(jnp.int32, (8, width), 1)
    out = pl.pallas_call(
        probe, out_shape=jax.ShapeDtypeStruct((8, width), jnp.int32))(x)
    return int(out[0, 0]) == width - 1


def _tensorcores_per_chip():
    """Best-effort detection; only affects performance, never correctness."""
    try:
        kind = jax.devices()[0].device_kind.lower()
    except Exception:
        return 1
    return 2 if ("7" in kind or "v4" in kind) else 1


def _images_per_grid_step(n):
    tc = _tensorcores_per_chip()
    if tc > 1 and n % tc == 0:
        return n // tc      # one grid step per TensorCore (v7x)
    return n                # single-TC chips: fold whole batch into lanes


# ------------------------ parameter prep (wrapper side) ------------------------

def _fold_bn(conv_bias, bn):
    gamma, beta, mean, var = bn
    scale = gamma / jnp.sqrt(var + BN_EPS)
    shift = (conv_bias - mean) * scale + beta
    return scale, shift


def _tapify(w_hwio):
    # (3, 3, Cin, Cout) -> (9, Cout, Cin); tap t = (dh+1)*3 + (dw+1).
    kh, kw, cin, cout = w_hwio.shape
    return jnp.transpose(w_hwio, (0, 1, 3, 2)).reshape(kh * kw, cout, cin)


def pack_params(params, n_class):
    CH = NUM_HIDDEN
    CFP = max(8, _round_up(n_class, 8))

    # conv0: fold BN scale into the weights (f32), then cast to bf16.
    w0, b0 = params["conv0"]
    s0, shift0 = _fold_bn(b0, params["bn0"])
    w0_t = _tapify(w0) * s0[None, :, None]

    wh_list, bh_list, sres_list = [], [], []
    for i in range(1, NUM_BLOCKS + 1):
        w1, b1 = params[f"conv{i}_1"]
        s1, shf1 = _fold_bn(b1, params[f"bn{i}_1"])
        wh_list.append(_tapify(w1) * s1[None, :, None])   # scale folded
        bh_list.append(shf1)

        w2, b2 = params[f"conv{i}_2"]
        s2, shf2 = _fold_bn(b2, params[f"bn{i}_2"])
        wh_list.append(_tapify(w2))                       # residual: keep scale
        bh_list.append(shf2)
        sres_list.append(s2)

    wf, bf = params["conv_final"]
    wf_t = _tapify(wf)                                    # (9, n_class, CH)
    pad = CFP - wf_t.shape[1]
    wf_t = jnp.pad(wf_t, ((0, 0), (0, pad), (0, 0)))
    bf_p = jnp.pad(bf, ((0, pad),))

    return {
        "w0": w0_t.astype(jnp.bfloat16),                              # (9, CH, C0)
        "b0": shift0.reshape(CH, 1).astype(jnp.float32),
        "wh": jnp.concatenate(wh_list, 0).astype(jnp.bfloat16),       # (108, CH, CH)
        "sres": jnp.stack(sres_list).reshape(NUM_BLOCKS, CH, 1).astype(jnp.float32),
        "bh": jnp.stack(bh_list).reshape(2 * NUM_BLOCKS, CH, 1).astype(jnp.float32),
        "wf": wf_t.astype(jnp.bfloat16),                              # (9, CFP, CH)
        "bf": bf_p.reshape(CFP, 1).astype(jnp.float32),
    }


def make_forward(im_channel, n_class, roll_np_like, images_per_step):
    C0 = 2 * im_channel
    CH = NUM_HIDDEN
    CFP = max(8, _round_up(n_class, 8))
    G = images_per_step

    @jax.jit
    def forward(x1_nchw, x2_nchw, packed):
        N, _, H, W = x1_nchw.shape
        HW = H * W
        g = G if (G and N % G == 0) else 1
        NG = N // g
        LANES = g * HW

        # NCHW is already the lane-dense (C, H*W) layout; fold g images per
        # grid step onto the lane axis.
        x = jnp.concatenate([x1_nchw, x2_nchw], axis=1).astype(jnp.float32)
        x = x.reshape(NG, g, C0, HW)
        x = jnp.transpose(x, (0, 2, 1, 3)).reshape(NG, C0, LANES)

        # Per-tap halo masks, (9, 1, LANES).  lane % HW keeps taps from
        # leaking across image boundaries when the batch is folded into lanes.
        lane = jnp.arange(LANES, dtype=jnp.int32)
        q = lane % HW
        r = q // W
        c = q % W
        masks = []
        for dh in (-1, 0, 1):
            for dw in (-1, 0, 1):
                masks.append((r + dh >= 0) & (r + dh < H)
                             & (c + dw >= 0) & (c + dw < W))
        masks = jnp.stack(masks).astype(jnp.float32).reshape(9, 1, LANES)

        kernel = _make_fused_kernel(W, LANES, NUM_BLOCKS, roll_np_like)

        out = pl.pallas_call(
            kernel,
            out_shape=jax.ShapeDtypeStruct((NG, CFP, LANES), jnp.float32),
            grid=(NG,),
            in_specs=[
                pl.BlockSpec((1, C0, LANES), lambda n: (n, 0, 0)),          # input
                pl.BlockSpec((9, 1, LANES), lambda n: (0, 0, 0)),           # tap masks
                pl.BlockSpec((9, CH, C0), lambda n: (0, 0, 0)),             # w0 (bf16)
                pl.BlockSpec((CH, 1), lambda n: (0, 0)),                    # bn0 shift
                pl.BlockSpec((9 * 2 * NUM_BLOCKS, CH, CH),
                             lambda n: (0, 0, 0)),                          # hidden W
                pl.BlockSpec((NUM_BLOCKS, CH, 1), lambda n: (0, 0, 0)),     # res scales
                pl.BlockSpec((2 * NUM_BLOCKS, CH, 1), lambda n: (0, 0, 0)), # shifts
                pl.BlockSpec((9, CFP, CH), lambda n: (0, 0, 0)),            # final W
                pl.BlockSpec((CFP, 1), lambda n: (0, 0)),                   # final bias
            ],
            out_specs=pl.BlockSpec((1, CFP, LANES), lambda n: (n, 0, 0)),
            compiler_params=pltpu.CompilerParams(
                dimension_semantics=("parallel",)),
        )(x, masks, packed["w0"], packed["b0"], packed["wh"],
          packed["sres"], packed["bh"], packed["wf"], packed["bf"])

        out = out.reshape(NG, CFP, g, HW)
        out = jnp.transpose(out, (0, 2, 1, 3)).reshape(N, CFP, H, W)
        return out[:, :n_class]

    return forward


# ------------------------- parameters (deterministic) -------------------------

def init_params(key, im_channel, n_class, num_hidden=NUM_HIDDEN):
    params = {}

    def conv_init(k, cin, cout):
        k1, k2 = jax.random.split(k)
        bound = 1.0 / math.sqrt(cin * 9)
        w = jax.random.uniform(k1, (3, 3, cin, cout), jnp.float32, -bound, bound)
        b = jax.random.uniform(k2, (cout,), jnp.float32, -bound, bound)
        return w, b

    def bn_init(k, c):
        k1, k2, k3, k4 = jax.random.split(k, 4)
        gamma = jax.random.uniform(k1, (c,), jnp.float32, 0.5, 1.5)
        beta = jax.random.uniform(k2, (c,), jnp.float32, -0.5, 0.5)
        mean = jax.random.uniform(k3, (c,), jnp.float32, -0.5, 0.5)
        var = jax.random.uniform(k4, (c,), jnp.float32, 0.5, 1.5)
        return gamma, beta, mean, var

    keys = jax.random.split(key, 32)
    ki = iter(range(32))

    params["conv0"] = conv_init(keys[next(ki)], 2 * im_channel, num_hidden)
    params["bn0"] = bn_init(keys[next(ki)], num_hidden)
    for i in range(1, NUM_BLOCKS + 1):
        for j in (1, 2):
            params[f"conv{i}_{j}"] = conv_init(keys[next(ki)], num_hidden, num_hidden)
            params[f"bn{i}_{j}"] = bn_init(keys[next(ki)], num_hidden)
    params["conv_final"] = conv_init(keys[next(ki)], num_hidden, n_class)
    return params


# ----------------------------- pure-JAX reference -----------------------------

def _ref_conv(x, w, b):
    y = lax.conv_general_dilated(
        x, w, (1, 1), "SAME", dimension_numbers=("NHWC", "HWIO", "NHWC"))
    return y + b


def _ref_bn(x, bn):
    gamma, beta, mean, var = bn
    return (x - mean) / jnp.sqrt(var + BN_EPS) * gamma + beta


def reference_forward(x1_nchw, x2_nchw, params):
    x1 = jnp.transpose(x1_nchw, (0, 2, 3, 1))
    x2 = jnp.transpose(x2_nchw, (0, 2, 3, 1))
    x = jnp.concatenate([x1, x2], axis=-1)
    w, b = params["conv0"]
    x = _ref_bn(_ref_conv(x, w, b), params["bn0"])
    for i in range(1, NUM_BLOCKS + 1):
        w1, b1 = params[f"conv{i}_1"]
        y = jax.nn.relu(_ref_bn(_ref_conv(x, w1, b1), params[f"bn{i}_1"]))
        w2, b2 = params[f"conv{i}_2"]
        x = jax.nn.relu(_ref_bn(_ref_conv(y, w2, b2) + x, params[f"bn{i}_2"]))
    wf, bf = params["conv_final"]
    motion = _ref_conv(x, wf, bf)
    return jnp.transpose(motion, (0, 3, 1, 2))


# ----------------------------------- main -----------------------------------

if __name__ == "__main__":
    im_size, im_channel, n_class = 16, 4, 4
    N = 2

    key = jax.random.PRNGKey(0)
    kx1, kx2, kp = jax.random.split(key, 3)
    x1 = jax.random.normal(kx1, (N, im_channel, im_size, im_size), jnp.float32)
    x2 = jax.random.normal(kx2, (N, im_channel, im_size, im_size), jnp.float32)
    params = init_params(kp, im_channel, n_class)

    roll_np_like = _detect_roll_is_numpy_like()
    packed = pack_params(params, n_class)
    G = _images_per_grid_step(N)
    forward = make_forward(im_channel, n_class, roll_np_like, G)

    out = jax.block_until_ready(forward(x1, x2, packed))
    assert out.shape == (N, n_class, im_size, im_size)

    ref = jax.block_until_ready(reference_forward(x1, x2, params))
    max_err = float(jnp.max(jnp.abs(out - ref)))
    assert jnp.allclose(out, ref, atol=5e-2, rtol=5e-2), max_err

    print("KERNEL_OK")
</pallas_src>

<mosaic_0001>
module attributes {stable_mosaic.version = 11 : i64} {
  func.func @probe(%arg0: memref<8x512xi32, #tpu.memory_space<vmem>>, %arg1: memref<8x512xi32, #tpu.memory_space<vmem>>) attributes {dimension_semantics = [], scalar_prefetch = 0 : i64, scratch_operands = 0 : i64, tpu.core_type = #tpu.core_type<tc>} {
    %c0 = arith.constant 0 : index
    %c0_0 = arith.constant 0 : index
    %0 = vector.load %arg0[%c0, %c0_0] : memref<8x512xi32, #tpu.memory_space<vmem>>, vector<8x512xi32>
    %c1_i32 = arith.constant 1 : i32
    %1 = tpu.dynamic_rotate %0 by %c1_i32 dim 1 : vector<8x512xi32>, i32 -> vector<8x512xi32>
    %c0_1 = arith.constant 0 : index
    %c0_2 = arith.constant 0 : index
    %2 = vector.load %arg1[%c0_1, %c0_2] : memref<8x512xi32, #tpu.memory_space<vmem>>, vector<8x512xi32>
    tpu.vector_store %arg1[%c0_1, %c0_2], %1 {strides = array<i32>} : memref<8x512xi32, #tpu.memory_space<vmem>>, vector<8x512xi32>,
    return
  }
}

</mosaic_0001>

<llo_original>
// kernel: tpu_custom_call.1
$region0: #{tpu_custom_call.1}
  #allocation0 [shape = 'u32[]', space=smem, size = 0x4, offset = 0x4, fixed_abs, tag = 'smem constant byte address 0x4 - core index']
  #allocation1 [shape = 'u32[144,128]{1,0:T(1,128)}', space=vmem, size = 0x12000, scoped, tag = 'internal scratch']
  %s0 = inlined_call_operand.hbm [shape: s32[8,512], index: 0, kind: input, shape index: {}]
  %s1 = inlined_call_operand.hbm [shape: s32[8,512], index: 1, kind: output, shape index: {}]
  %s2 = sld [smem:[#allocation0]]
  $region18: #{tpu_custom_call.1} parent=0
    _
  %s4 = ssub.s32 1, %s2
  %s5 = scalar_select 0, %s4, %s2
  $region1: #{tpu_custom_call.1} parent=0
    #allocation2 [shape = 'u8[16384]{0}', space=vmem, size = 0x4000, scoped, tag = 'input window, operand 0, single buffered']
    #allocation3 [shape = 's32[1]{0}', space=sflag, size = 0x4, scoped, tag = 'scoped memory for tpu_custom_call.1']
    #allocation4 [shape = 's32[1]{0}', space=sflag, size = 0x4, scoped, tag = 'scoped memory for tpu_custom_call.1']
    #allocation5 [shape = 'u8[16384]{0}', space=vmem, size = 0x4000, scoped, tag = 'output window, operand 0, single buffered']
    %6 = vsyncpa [#allocation3], 0
    %7 = vsyncpa [#allocation4], 0
    // Predicated region
    $region2: #{tpu_custom_call.1} parent=1 // pred_check
      _
    $region3: #{tpu_custom_call.1} parent=1 // pred_check_branch
      %9 = sbr.rel (0) target = $region5
    $region4: #{tpu_custom_call.1} parent=1 // pred_region
      %s11 = ssub.s32 512, 512
      %12 = vsyncadd [#allocation3], %s11
      %s14 = sshll.u32 [#allocation2], 4
      %s15 = int_to_ptr.vmem [resolvable:$true] %s14
      %17 = dma.hbm_to_vmem [thread:$0]  %s0, 512, %s15, [#allocation3]
    $region5: #{tpu_custom_call.1} parent=1 // pred_fallthru
      _
    // Predicated region
    $region6: #{tpu_custom_call.1} parent=1 // pred_check
      _
    $region7: #{tpu_custom_call.1} parent=1 // pred_check_branch
      %19 = sbr.rel (0) target = $region9
    $region8: #{tpu_custom_call.1} parent=1 // pred_region
      %20 = dma.done [#allocation3], 512
    $region9: #{tpu_custom_call.1} parent=1 // pred_fallthru
      _
    %v21 = vld [vmem:[#allocation2] sm:$0xff]
    %v22 = vld [vmem:[#allocation2 + $0x8] sm:$0xff]
    %v23 = vld [vmem:[#allocation2 + $0x10] sm:$0xff]
    %v24 = vld [vmem:[#allocation2 + $0x18] sm:$0xff]
    %25 = vrot.lane.b32.xlu0 %v21, 1
    %v26 = vpop.permute.xlu0 %25
    %27 = vrot.lane.b32.xlu0 %v22, 1
    %v28 = vpop.permute.xlu0 %27
    %29 = vrot.lane.b32.xlu0 %v23, 1
    %v30 = vpop.permute.xlu0 %29
    %31 = vrot.lane.b32.xlu0 %v24, 1
    %v32 = vpop.permute.xlu0 %31
    %v33 = vlaneseq
    %v34 = vand.u32 %v33, 127
    %vm35 = vcmp.lt.s32.totalorder %v34, 1
    %v36 = vsel %vm35, %v30, %v32
    %v37 = vsel %vm35, %v28, %v30
    %v38 = vsel %vm35, %v26, %v28
    %v39 = vsel %vm35, %v32, %v26
    %40 = vst [vmem:[#allocation5] sm:$0xff] %v39
    %41 = vst [vmem:[#allocation5 + $0x8] sm:$0xff] %v38
    %42 = vst [vmem:[#allocation5 + $0x10] sm:$0xff] %v37
    %43 = vst [vmem:[#allocation5 + $0x18] sm:$0xff] %v36
    // Predicated region
    $region10: #{tpu_custom_call.1} parent=1 // pred_check
      _
    $region11: #{tpu_custom_call.1} parent=1 // pred_check_branch
      %45 = sbr.rel (0) target = $region13
    $region12: #{tpu_custom_call.1} parent=1 // pred_region
      %s47 = ssub.s32 512, 512
      %48 = vsyncadd [#allocation4], %s47
      %s50 = sshll.u32 [#allocation5], 4
      %s51 = int_to_ptr.vmem [resolvable:$true] %s50
      %53 = dma.vmem_to_hbm [thread:$0]  %s51, 512, %s1, [#allocation4]
    $region13: #{tpu_custom_call.1} parent=1 // pred_fallthru
      _
    // Predicated region
    $region14: #{tpu_custom_call.1} parent=1 // pred_check
      _
    $region15: #{tpu_custom_call.1} parent=1 // pred_check_branch
      %55 = sbr.rel (0) target = $region17
    $region16: #{tpu_custom_call.1} parent=1 // pred_region
      %56 = dma.done [#allocation4], 512
    $region17: #{tpu_custom_call.1} parent=1 // pred_fallthru
      _
    %57 = vsyncpa [#allocation3], 1
    %58 = vsyncpa [#allocation4], 1

</llo_original>
